<compile_context>
chip_gen: v7x
topology: tpu7x:2x2x1
jax: 0.10.0
libtpu: 0.0.40
codegen_flags: <defaults>
</compile_context>

<pallas_src>
import functools

import jax
import jax.numpy as jnp
from jax.experimental import pallas as pl
from jax.experimental.pallas import tpu as pltpu


def _nll_kernel(pred_ref, target_ref, out_ref, acc_ref, *,
                total_b, from_logits, needs_row_mask):
    # pred_ref   : (TB, C) float log-probs (or raw logits if from_logits)  [VMEM]
    # target_ref : (TB, 1) int32 class indices                             [VMEM]
    # out_ref    : (1,)    float32 scalar loss                             [SMEM]
    # acc_ref    : (1,)    float32 running sum, persists across grid steps [SMEM scratch]
    pid = pl.program_id(0)
    nb = pl.num_programs(0)

    @pl.when(pid == 0)
    def _init():
        acc_ref[0] = jnp.float32(0.0)

    # Upcast in-kernel (handles bf16 inputs without a wrapper-side f32 copy).
    x = pred_ref[...].astype(jnp.float32)            # (TB, C)
    tb, c = x.shape

    if from_logits:
        # Fused, numerically-stable log_softmax.
        row_max = jnp.max(x, axis=-1, keepdims=True)
        x = x - (row_max + jnp.log(jnp.sum(jnp.exp(x - row_max), axis=-1, keepdims=True)))

    col_ids = jax.lax.broadcasted_iota(jnp.int32, (tb, c), dimension=1)
    mask = col_ids == target_ref[...]                # one-hot selection per row
    if needs_row_mask:
        # Mask out sublane-padded rows of the (possibly partial) last tile.
        row_ids = jax.lax.broadcasted_iota(jnp.int32, (tb, c), dimension=0) + pid * tb
        mask = jnp.logical_and(mask, row_ids < total_b)

    picked = jnp.where(mask, x, jnp.float32(0.0))
    acc_ref[0] += jnp.sum(picked)

    @pl.when(pid == nb - 1)
    def _finalize():
        # NLLLoss (mean reduction, no class weights): fold negate + mean into one multiply.
        out_ref[0] = acc_ref[0] * jnp.float32(-1.0 / total_b)


def nll_loss_pallas(pred, target, *, from_logits=False, block_b=None):
    """NLLLoss(mean) over pred (B, C) and target (B,).

    from_logits=True additionally fuses log_softmax into the kernel (pred is then raw
    logits).  block_b tiles the batch axis for large B.  Returns a scalar float32.
    """
    B, C = pred.shape
    if block_b is None:
        block_b = B if B <= 1024 else 1024
    if block_b >= B:
        block_b = B                                   # single full-extent block
    else:
        block_b = max(8, (int(block_b) // 8) * 8)     # non-full blocks: sublane multiple
    nb = pl.cdiv(B, block_b)
    needs_row_mask = (nb * block_b) != B

    target2d = target.astype(jnp.int32).reshape(B, 1)
    kernel = functools.partial(
        _nll_kernel, total_b=B, from_logits=from_logits, needs_row_mask=needs_row_mask)

    out = pl.pallas_call(
        kernel,
        out_shape=jax.ShapeDtypeStruct((1,), jnp.float32),
        grid_spec=pltpu.PrefetchScalarGridSpec(
            num_scalar_prefetch=0,
            grid=(nb,),
            in_specs=[
                pl.BlockSpec((block_b, C), lambda i: (i, 0)),
                pl.BlockSpec((block_b, 1), lambda i: (i, 0)),
            ],
            out_specs=pl.BlockSpec(memory_space=pltpu.MemorySpace.SMEM),
            scratch_shapes=[pltpu.SMEM((1,), jnp.float32)],
        ),
        compiler_params=pltpu.CompilerParams(
            dimension_semantics=("arbitrary",),       # batch axis is a reduction here
        ),
    )(pred, target2d)
    return out[0]


def get_loss_forward(pred, target, trans_feat, gp_weight=10, weight=None):
    """JAX/Pallas equivalent of GetLoss.forward (pred expected to be log-probs)."""
    if weight is not None:
        # TODO(synk): per-class NLLLoss weights not implemented (module default is weight=None).
        raise NotImplementedError("per-class NLLLoss weights not implemented")
    total_loss = nll_loss_pallas(pred, target, from_logits=False)
    if trans_feat.ndim > 2:
        # TODO(synk): gradient-penalty branch references an undefined `self.discriminator`
        # and torch.autograd.grad in the original module; no Pallas equivalent (dead branch
        # for 2-D trans_feat as produced by pointnet2_cls_ssg).
        raise NotImplementedError("gradient-penalty branch not translatable")
    return total_loss


if __name__ == "__main__":
    key = jax.random.PRNGKey(0)
    k1, k2, k3, k4, k5 = jax.random.split(key, 5)

    # ---- Test 1: module-faithful path (pred already log-probs), pointnet2-like tiny shapes.
    B, C, F = 8, 16, 32
    logits = jax.random.normal(k1, (B, C), dtype=jnp.float32)
    pred = jax.nn.log_softmax(logits, axis=-1)
    target = jax.random.randint(k2, (B,), 0, C, dtype=jnp.int32)
    trans_feat = jax.random.normal(k3, (B, F), dtype=jnp.float32)   # 2-D -> GP branch dead

    loss = jax.block_until_ready(get_loss_forward(pred, target, trans_feat))
    ref = -jnp.mean(pred[jnp.arange(B), target])
    assert jnp.allclose(loss, ref, atol=1e-5, rtol=1e-5), (loss, ref)

    # ---- Test 2: fused log_softmax path + batch tiling (grid > 1, masked partial last tile).
    B2, C2 = 300, 40
    logits2 = jax.random.normal(k4, (B2, C2), dtype=jnp.float32)
    target2 = jax.random.randint(k5, (B2,), 0, C2, dtype=jnp.int32)
    loss2 = jax.block_until_ready(
        nll_loss_pallas(logits2, target2, from_logits=True, block_b=128))
    lp2 = jax.nn.log_softmax(logits2, axis=-1)
    ref2 = -jnp.mean(lp2[jnp.arange(B2), target2])
    assert jnp.allclose(loss2, ref2, atol=1e-4, rtol=1e-5), (loss2, ref2)

    # ---- Test 3: bf16 input, in-kernel upcast path.
    pred_bf16 = pred.astype(jnp.bfloat16)
    loss3 = jax.block_until_ready(nll_loss_pallas(pred_bf16, target))
    ref3 = -jnp.mean(pred_bf16.astype(jnp.float32)[jnp.arange(B), target])
    assert jnp.allclose(loss3, ref3, atol=1e-3, rtol=1e-3), (loss3, ref3)

    print("KERNEL_OK")
</pallas_src>

<mosaic_0001>
module attributes {stable_mosaic.version = 11 : i64} {
  func.func @_nll_kernel(%arg0: i32, %arg1: memref<8x16xf32, #tpu.memory_space<vmem>>, %arg2: memref<8x1xi32, #tpu.memory_space<vmem>>, %arg3: memref<1xf32, #tpu.memory_space<smem>>, %arg4: memref<1xf32, #tpu.memory_space<smem>>) attributes {dimension_semantics = [#tpu.dimension_semantics<arbitrary>], iteration_bounds = array<i64: 1>, scalar_prefetch = 0 : i64, scratch_operands = 1 : i64, tpu.core_type = #tpu.core_type<tc>, window_params = [{transform_indices = @transform_0, window_bounds = array<i64: 8, 16>}, {transform_indices = @transform_1, window_bounds = array<i64: 8, 1>}, {transform_indices = @transform_2, window_bounds = array<i64: 1>}]} {
    %c0_i32 = arith.constant 0 : i32
    %0 = arith.cmpi eq, %arg0, %c0_i32 : i32
    %1 = arith.extui %0 : i1 to i32
    %c0_i32_0 = arith.constant 0 : i32
    %2 = arith.cmpi ne, %1, %c0_i32_0 : i32
    scf.if %2 {
      %cst_9 = arith.constant 0.000000e+00 : f32
      %c0_10 = arith.constant 0 : index
      %20 = memref.load %arg4[%c0_10] : memref<1xf32, #tpu.memory_space<smem>>
      memref.store %cst_9, %arg4[%c0_10] : memref<1xf32, #tpu.memory_space<smem>>
    } else {
    }
    %c0 = arith.constant 0 : index
    %c0_1 = arith.constant 0 : index
    %3 = vector.load %arg1[%c0, %c0_1] : memref<8x16xf32, #tpu.memory_space<vmem>>, vector<8x16xf32>
    %4 = tpu.iota {dimensions = array<i32: 1>} : vector<8x16xi32>
    %c0_2 = arith.constant 0 : index
    %c0_3 = arith.constant 0 : index
    %5 = vector.load %arg2[%c0_2, %c0_3] : memref<8x1xi32, #tpu.memory_space<vmem>>, vector<8x1xi32>
    %6 = vector.broadcast %5 : vector<8x1xi32> to vector<8x16xi32>
    %7 = arith.cmpi eq, %4, %6 : vector<8x16xi32>
    %cst = arith.constant 0.000000e+00 : f32
    %8 = vector.broadcast %cst : f32 to vector<8x16xf32>
    %9 = arith.select %7, %3, %8 : vector<8x16xi1>, vector<8x16xf32>
    %c0_4 = arith.constant 0 : index
    %10 = memref.load %arg4[%c0_4] : memref<1xf32, #tpu.memory_space<smem>>
    %11 = vector.shape_cast %9 : vector<8x16xf32> to vector<1x8x16xf32>
    %cst_5 = arith.constant dense<0.000000e+00> : vector<1xf32>
    %12 = vector.multi_reduction <add>, %11, %cst_5 [1, 2] : vector<1x8x16xf32> to vector<1xf32>
    %13 = vector.shape_cast %12 : vector<1xf32> to vector<1x1x1xf32>
    %14 = vector.extract %13[0, 0, 0] : f32 from vector<1x1x1xf32>
    %15 = arith.addf %10, %14 : f32
    %c0_6 = arith.constant 0 : index
    %16 = memref.load %arg4[%c0_6] : memref<1xf32, #tpu.memory_space<smem>>
    memref.store %15, %arg4[%c0_6] : memref<1xf32, #tpu.memory_space<smem>>
    %c0_i32_7 = arith.constant 0 : i32
    %17 = arith.cmpi eq, %arg0, %c0_i32_7 : i32
    %18 = arith.extui %17 : i1 to i32
    %c0_i32_8 = arith.constant 0 : i32
    %19 = arith.cmpi ne, %18, %c0_i32_8 : i32
    scf.if %19 {
      %c0_9 = arith.constant 0 : index
      %20 = memref.load %arg4[%c0_9] : memref<1xf32, #tpu.memory_space<smem>>
      %cst_10 = arith.constant -1.250000e-01 : f32
      %21 = arith.mulf %20, %cst_10 : f32
      %c0_11 = arith.constant 0 : index
      %22 = memref.load %arg3[%c0_11] : memref<1xf32, #tpu.memory_space<smem>>
      memref.store %21, %arg3[%c0_11] : memref<1xf32, #tpu.memory_space<smem>>
    } else {
    }
    return
  }
  func.func @transform_0(%arg0: i32) -> (i32, i32) {
    %c0_i32 = arith.constant 0 : i32
    %c0_i32_0 = arith.constant 0 : i32
    return %arg0, %c0_i32 : i32, i32
  }
  func.func @transform_1(%arg0: i32) -> (i32, i32) {
    %c0_i32 = arith.constant 0 : i32
    %c0_i32_0 = arith.constant 0 : i32
    return %arg0, %c0_i32 : i32, i32
  }
  func.func @transform_2(%arg0: i32) -> i32 {
    %c0_i32 = arith.constant 0 : i32
    %c0_i32_0 = arith.constant 0 : i32
    return %c0_i32 : i32
  }
}

</mosaic_0001>

<llo_original>
// kernel: tpu_custom_call.1
$region0: #{tpu_custom_call.1}
  #allocation0 [shape = 'u32[]', space=smem, size = 0x4, offset = 0x4, fixed_abs, tag = 'smem constant byte address 0x4 - core index']
  #allocation1 [shape = 'u32[144,128]{1,0:T(1,128)}', space=vmem, size = 0x12000, scoped, tag = 'internal scratch']
  #allocation2 [shape = 'f32[1]{0:T(128)}', space=smem, size = 0x200, scoped, tag = 'scratch operand']
  %s0 = inlined_call_operand.vmem [shape: f32[8,16], index: 0, kind: input, shape index: {}]
  %s1 = inlined_call_operand.vmem [shape: s32[8,1], index: 1, kind: input, shape index: {}]
  %s2 = inlined_call_operand.hbm [shape: f32[1], index: 2, kind: output, shape index: {}]
  %s3 = sld [smem:[#allocation0]]
  $region26: #{tpu_custom_call.1} parent=0
    _
  %s5 = ssub.s32 1, %s3
  %s6 = scalar_select 0, %s5, %s3
  $region1: #{tpu_custom_call.1} parent=0
    #allocation3 [shape = 'u8[512]{0}', space=smem, size = 0x200, scoped, tag = 'output window, operand 0, single buffered']
    #allocation4 [shape = 's32[1]{0}', space=sflag, size = 0x4, scoped, tag = 'scoped memory for tpu_custom_call.1']
    %7 = vsyncpa [#allocation4], 0
    // Predicated region
    $region2: #{tpu_custom_call.1} parent=1 // pred_check
      _
    $region3: #{tpu_custom_call.1} parent=1 // pred_check_branch
      %9 = sbr.rel (0) target = $region5
    $region4: #{tpu_custom_call.1} parent=1 // pred_region
      _
    $region5: #{tpu_custom_call.1} parent=1 // pred_fallthru
      _
    // Predicated region
    $region6: #{tpu_custom_call.1} parent=1 // pred_check
      _
    $region7: #{tpu_custom_call.1} parent=1 // pred_check_branch
      %11 = sbr.rel (0) target = $region9
    $region8: #{tpu_custom_call.1} parent=1 // pred_region
      _
    $region9: #{tpu_custom_call.1} parent=1 // pred_fallthru
      _
    %p12 = scmp.eq.s32.totalorder 0, 0
    // Predicated region
    $region10: #{tpu_custom_call.1} parent=1 // pred_check
      %p13 = pneg %p12
    $region11: #{tpu_custom_call.1} parent=1 // pred_check_branch
      %15 = sbr.rel (%p13) target = $region13
    $region12: #{tpu_custom_call.1} parent=1 // pred_region
      %s16 = scalar_lea.smem [#allocation2], 0
      %17 = sst [smem:[%s16]] 0.0
    $region13: #{tpu_custom_call.1} parent=1 // pred_fallthru
      _
    %v18 = vld [vmem:[%s0] sm:$0xff]
    %v19 = vlaneseq
    %v20 = vand.u32 %v19, 127
    %v21 = vld [vmem:[%s1] sm:$0xff]
    %22 = vset.pattern.permute.xlu0 0
    %23 = vperm.xlu0 %22, %v21
    %v24 = vpop.permute.xlu0 %23
    %vm25 = vcmp.eq.s32.totalorder %v20, %v24
    %v26 = vsel %vm25, %v18, 0.0
    %s27 = sld [smem:[#allocation2]]
    %vm28 = vcmask 130048
    %v29 = vsel %vm28, %v26, 0.0
    %30 = vadd.xlane.f32.xlu0 %v29
    %v31 = vpop.xlane.xlu0 %30
    %v32 = vrot.slane %v31, 4
    %v33 = vadd.f32 %v31, %v32
    %v34 = vrot.slane %v33, 2
    %v35 = vadd.f32 %v33, %v34
    %v36 = vrot.slane %v35, 1
    %v37 = vadd.f32 %v35, %v36
    %s38 = vtos %v37
    %s39 = sadd.f32 %s27, %s38
    %s40 = scalar_lea.smem [#allocation2], 0
    %41 = sst [smem:[%s40]] %s39
    // Predicated region
    $region14: #{tpu_custom_call.1} parent=1 // pred_check
      %p42 = pneg %p12
    $region15: #{tpu_custom_call.1} parent=1 // pred_check_branch
      %44 = sbr.rel (%p42) target = $region17
    $region16: #{tpu_custom_call.1} parent=1 // pred_region
      %s45 = sld [smem:[#allocation2]]
      %s46 = smul.f32 %s45, -0.125
      %s47 = scalar_lea.smem [#allocation3], 0
      %48 = sst [smem:[%s47]] %s46
    $region17: #{tpu_custom_call.1} parent=1 // pred_fallthru
      _
    // Predicated region
    $region18: #{tpu_custom_call.1} parent=1 // pred_check
      _
    $region19: #{tpu_custom_call.1} parent=1 // pred_check_branch
      %50 = sbr.rel (0) target = $region21
    $region20: #{tpu_custom_call.1} parent=1 // pred_region
      %s52 = ssub.s32 16, 16
      %53 = vsyncadd [#allocation4], %s52
      %56 = dma.smem_to_hbm [#allocation3], 16, %s2, [#allocation4]
    $region21: #{tpu_custom_call.1} parent=1 // pred_fallthru
      _
    // Predicated region
    $region22: #{tpu_custom_call.1} parent=1 // pred_check
      _
    $region23: #{tpu_custom_call.1} parent=1 // pred_check_branch
      %58 = sbr.rel (0) target = $region25
    $region24: #{tpu_custom_call.1} parent=1 // pred_region
      %59 = dma.done [#allocation4], 16
    $region25: #{tpu_custom_call.1} parent=1 // pred_fallthru
      _
    %60 = sfence
    %61 = vsyncpa [#allocation4], 1

</llo_original>
